<compile_context>
chip_gen: v6e
topology: v6e:2x2x1
jax: 0.10.0
libtpu: 0.0.40
codegen_flags: <defaults>
</compile_context>

<pallas_src>
import jax
import jax.numpy as jnp
from jax import lax
from jax.experimental import pallas as pl
from jax.experimental.pallas import tpu as pltpu


def _round_up(x, m):
    return -(-x // m) * m


# -------- pass 1: conv tile -> per-channel sum / sum-of-squares ------------

def _stats_kernel(p_ref, w_ref, sum_ref, sumsq_ref):
    """Recompute path: statistics only (P is re-read in pass 2)."""
    @pl.when(pl.program_id(1) == 0)
    def _():
        sum_ref[...] = jnp.zeros_like(sum_ref)
        sumsq_ref[...] = jnp.zeros_like(sumsq_ref)

    # No conv bias: BN's mean subtraction cancels it exactly, and without it
    # zero-padded rows contribute exactly 0 to sum / sumsq (no masking needed).
    acc = jnp.dot(p_ref[...], w_ref[...], preferred_element_type=jnp.float32)
    sum_ref[...] += jnp.sum(acc, axis=0, keepdims=True)
    sumsq_ref[...] += jnp.sum(acc * acc, axis=0, keepdims=True)


def _stats_store_kernel(p_ref, w_ref, sum_ref, sumsq_ref, y_ref):
    """Store path: statistics + bf16 pre-BN conv output (pass 2 is elementwise)."""
    @pl.when(pl.program_id(1) == 0)
    def _():
        sum_ref[...] = jnp.zeros_like(sum_ref)
        sumsq_ref[...] = jnp.zeros_like(sumsq_ref)

    acc = jnp.dot(p_ref[...], w_ref[...], preferred_element_type=jnp.float32)
    y_bf = acc.astype(y_ref.dtype)
    y_ref[...] = y_bf
    # Stats from the rounded values so pass-2 normalisation is self-consistent.
    accr = y_bf.astype(jnp.float32)
    sum_ref[...] += jnp.sum(accr, axis=0, keepdims=True)
    sumsq_ref[...] += jnp.sum(accr * accr, axis=0, keepdims=True)


# -------- pass 2: apply BatchNorm (precomputed scale/shift) + ReLU ---------

def _apply_matmul_kernel(p_ref, w_ref, scale_ref, shift_ref, o_ref):
    acc = jnp.dot(p_ref[...], w_ref[...], preferred_element_type=jnp.float32)
    o_ref[...] = jnp.maximum(acc * scale_ref[...] + shift_ref[...],
                             0.0).astype(o_ref.dtype)


def _apply_elementwise_kernel(y_ref, scale_ref, shift_ref, o_ref):
    y = y_ref[...].astype(jnp.float32)
    o_ref[...] = jnp.maximum(y * scale_ref[...] + shift_ref[...],
                             0.0).astype(o_ref.dtype)


# ---------------------------------------------------------------------------

def conv_bn_relu(x, w, b, gamma, beta, *, stride=1, padding=1, dilation=1,
                 eps=1e-5, block_m=1024, out_dtype=jnp.float32):
    """x: (N, Cin, H, W) NCHW; w: (Cout, Cin, KH, KW); returns NCHW `out_dtype`.

    `b` (conv bias) is accepted for API parity but never enters the kernels:
    BatchNorm's mean subtraction cancels a per-channel constant exactly.
    """
    del b  # cancelled by BatchNorm (norm=True configuration)

    N, Cin, H, W_ = x.shape
    Cout, _, KH, KW = w.shape
    OH = (H + 2 * padding - dilation * (KH - 1) - 1) // stride + 1
    OW = (W_ + 2 * padding - dilation * (KW - 1) - 1) // stride + 1

    # ---- im2col (wrapper glue, plain JAX) ---------------------------------
    # TODO(synk): move this into the kernels (shifted-window matmuls / manual
    # DMA on an NHWC HBM input) to remove the KH*KW HBM expansion.
    xp = jnp.pad(x, ((0, 0), (0, 0), (padding, padding), (padding, padding)))
    cols = []
    for kh in range(KH):
        for kw in range(KW):
            h0, w0 = kh * dilation, kw * dilation
            cols.append(xp[:, :, h0:h0 + stride * OH:stride,
                               w0:w0 + stride * OW:stride])
    pat = jnp.stack(cols, axis=-1)            # (N, Cin, OH, OW, KH*KW)
    pat = pat.transpose(0, 2, 3, 1, 4)        # (N, OH, OW, Cin, KH*KW)

    M = N * OH * OW
    K = Cin * KH * KW

    # Layout padding: Cout -> lane-dense multiple of 128 (unmasked stores);
    # K -> multiple of 8 only (full-dim blocks), avoiding large zero-pad waste.
    Cp = _round_up(max(Cout, 128), 128)
    Kp = _round_up(K, 8)

    block_m = max(8, _round_up(min(int(block_m), _round_up(M, 8)), 8))
    grid_m = -(-M // block_m)
    # Split pass 1 across (up to) two TensorCores: leading PARALLEL axis, one
    # partial sum/sumsq slab per core, reduced in the wrapper.  On single-TC
    # chips this is just a reordering of the same tiles.
    num_cores = 2 if grid_m >= 2 else 1
    tiles_per_core = -(-grid_m // num_cores)
    grid_m = num_cores * tiles_per_core
    Mp = grid_m * block_m

    # bf16 matmul operands (f32 MXU accumulate); zero padding is inert.
    P = pat.reshape(M, K)
    P = jnp.pad(P, ((0, Mp - M), (0, Kp - K))).astype(jnp.bfloat16)
    W2 = jnp.pad(w.reshape(Cout, K).T.astype(jnp.float32),
                 ((0, Kp - K), (0, Cp - Cout))).astype(jnp.bfloat16)  # (Kp, Cp)
    gamma_p = jnp.pad(gamma.astype(jnp.float32), (0, Cp - Cout))
    beta_p = jnp.pad(beta.astype(jnp.float32), (0, Cp - Cout))

    # Shape-conditional pass-2 strategy: re-reading P costs ~2*Kp B/row (bf16);
    # a bf16 conv-output round trip costs ~4*Cp B/row.  Store when cheaper.
    store_intermediate = (2 * Kp) > (4 * Cp)

    # VMEM budget: double-buffered streamed operands + resident weights.
    per_step = 2 * block_m * Kp * 2 + 2 * block_m * Cp * 4 + Kp * Cp * 2
    if store_intermediate:
        per_step += 2 * block_m * Cp * 2
    vmem_limit = int(min(max(2 * per_step, 16 * 1024 * 1024),
                         48 * 1024 * 1024))   # stays under v7x's 64 MiB VMEM

    # ---- pass 1: per-channel sum / sum-of-squares over the whole batch -----
    p_idx = lambda c, i: (c * tiles_per_core + i, 0)
    stats_idx = lambda c, i: (0, c)

    in_specs1 = (pl.BlockSpec((block_m, Kp), p_idx),            # streamed P
                 pl.BlockSpec((Kp, Cp), lambda c, i: (0, 0)))   # resident W
    stats_shape = jax.ShapeDtypeStruct((1, num_cores * Cp), jnp.float32)

    if store_intermediate:
        kernel1 = _stats_store_kernel
        out_shape1 = (stats_shape, stats_shape,
                      jax.ShapeDtypeStruct((Mp, Cp), jnp.bfloat16))
        out_specs1 = (pl.BlockSpec((1, Cp), stats_idx),
                      pl.BlockSpec((1, Cp), stats_idx),
                      pl.BlockSpec((block_m, Cp), p_idx))
    else:
        kernel1 = _stats_kernel
        out_shape1 = (stats_shape, stats_shape)
        out_specs1 = (pl.BlockSpec((1, Cp), stats_idx),
                      pl.BlockSpec((1, Cp), stats_idx))

    res1 = pl.pallas_call(
        kernel1,
        out_shape=out_shape1,
        grid=(num_cores, tiles_per_core),
        in_specs=in_specs1,
        out_specs=out_specs1,
        compiler_params=pltpu.CompilerParams(
            dimension_semantics=(pltpu.PARALLEL, pltpu.ARBITRARY),
            vmem_limit_bytes=vmem_limit),
    )(P, W2)
    if store_intermediate:
        stat_sum, stat_sumsq, Y = res1
    else:
        (stat_sum, stat_sumsq), Y = res1, None

    # ---- per-channel scale / shift (tiny XLA glue between the passes) ------
    total_sum = stat_sum.reshape(num_cores, Cp).sum(axis=0)
    total_sq = stat_sumsq.reshape(num_cores, Cp).sum(axis=0)
    mean = total_sum / M
    var = jnp.maximum(total_sq / M - mean * mean, 0.0)   # biased (training BN)
    inv = lax.rsqrt(var + eps)
    scale = (gamma_p * inv).reshape(1, Cp)
    shift = (beta_p - mean * gamma_p * inv).reshape(1, Cp)

    # ---- pass 2: apply BN + ReLU, stream output ----------------------------
    if store_intermediate:
        kernel2 = _apply_elementwise_kernel
        in_specs2 = (pl.BlockSpec((block_m, Cp), lambda i: (i, 0)),
                     pl.BlockSpec((1, Cp), lambda i: (0, 0)),
                     pl.BlockSpec((1, Cp), lambda i: (0, 0)))
        args2 = (Y, scale, shift)
    else:
        kernel2 = _apply_matmul_kernel
        in_specs2 = (pl.BlockSpec((block_m, Kp), lambda i: (i, 0)),
                     pl.BlockSpec((Kp, Cp), lambda i: (0, 0)),
                     pl.BlockSpec((1, Cp), lambda i: (0, 0)),
                     pl.BlockSpec((1, Cp), lambda i: (0, 0)))
        args2 = (P, W2, scale, shift)

    out = pl.pallas_call(
        kernel2,
        out_shape=jax.ShapeDtypeStruct((Mp, Cp), out_dtype),
        grid=(grid_m,),
        in_specs=in_specs2,
        out_specs=pl.BlockSpec((block_m, Cp), lambda i: (i, 0)),
        compiler_params=pltpu.CompilerParams(
            dimension_semantics=(pltpu.PARALLEL,),
            vmem_limit_bytes=vmem_limit),
    )(*args2)

    # Back to NCHW, drop layout padding.
    # TODO(synk): allow consumers to take the (M, Cout) NHWC view (and bf16)
    # directly to skip this extra slice + transpose HBM round trip.
    y = out[:M, :Cout].reshape(N, OH, OW, Cout).transpose(0, 3, 1, 2)
    return y


def _reference(x, w, b, gamma, beta, stride, padding, eps):
    y = lax.conv_general_dilated(
        x, w, (stride, stride), [(padding, padding), (padding, padding)],
        dimension_numbers=("NCHW", "OIHW", "NCHW"))
    y = y + b[None, :, None, None]
    mean = y.mean(axis=(0, 2, 3), keepdims=True)
    var = ((y - mean) ** 2).mean(axis=(0, 2, 3), keepdims=True)
    y = (y - mean) * lax.rsqrt(var + eps) * gamma[None, :, None, None] \
        + beta[None, :, None, None]
    return jnp.maximum(y, 0.0)


if __name__ == "__main__":
    key = jax.random.PRNGKey(0)
    k_x, k_w, k_b, k_g, k_bt, k_x2, k_w2 = jax.random.split(key, 7)

    # --- test 1: ConvBNReLU(4, 8, 3, stride=1, padding=1) — recompute path ---
    N, Cin, H, W = 2, 4, 16, 16
    Cout, KH, KW = 8, 3, 3
    stride, padding, eps = 1, 1, 1e-5

    x = jax.random.normal(k_x, (N, Cin, H, W), dtype=jnp.float32)
    fan_in = Cin * KH * KW
    w = jax.random.normal(k_w, (Cout, Cin, KH, KW), jnp.float32) * (fan_in ** -0.5)
    b = jax.random.normal(k_b, (Cout,), jnp.float32) * 0.1
    gamma = 1.0 + 0.1 * jax.random.normal(k_g, (Cout,), jnp.float32)
    beta = 0.1 * jax.random.normal(k_bt, (Cout,), jnp.float32)

    # block_m=128 -> 4 M-tiles (2 per "core" of the split stats pass).
    y = conv_bn_relu(x, w, b, gamma, beta, stride=stride, padding=padding,
                     eps=eps, block_m=128)
    y = jax.block_until_ready(y)
    assert y.shape == (N, Cout, H, W)

    # Tight check vs a reference fed the same bf16-rounded conv operands.
    xr = x.astype(jnp.bfloat16).astype(jnp.float32)
    wr = w.astype(jnp.bfloat16).astype(jnp.float32)
    y_ref_bf = _reference(xr, wr, b, gamma, beta, stride, padding, eps)
    assert jnp.allclose(y, y_ref_bf, atol=2e-3, rtol=2e-3), \
        float(jnp.abs(y - y_ref_bf).max())

    # Loose sanity check vs the exact f32 module semantics.
    y_ref = _reference(x, w, b, gamma, beta, stride, padding, eps)
    assert jnp.allclose(y, y_ref, atol=5e-2, rtol=5e-2), \
        float(jnp.abs(y - y_ref).max())

    # --- test 2: larger Cin (32) so Kp > 2*Cp — exercises the store path -----
    N2, Cin2, H2, W2_ = 1, 32, 8, 8
    x2 = jax.random.normal(k_x2, (N2, Cin2, H2, W2_), dtype=jnp.float32)
    fan2 = Cin2 * KH * KW
    w2 = jax.random.normal(k_w2, (Cout, Cin2, KH, KW), jnp.float32) * (fan2 ** -0.5)

    y2 = conv_bn_relu(x2, w2, b, gamma, beta, stride=1, padding=1, eps=eps)
    y2 = jax.block_until_ready(y2)
    assert y2.shape == (N2, Cout, H2, W2_)
    y2_ref = _reference(x2, w2, b, gamma, beta, 1, 1, eps)
    assert jnp.allclose(y2, y2_ref, atol=5e-2, rtol=5e-2), \
        float(jnp.abs(y2 - y2_ref).max())

    print("KERNEL_OK")
</pallas_src>

<mosaic_0001>
module attributes {stable_mosaic.version = 11 : i64} {
  func.func @_stats_kernel(%arg0: i32, %arg1: i32, %arg2: memref<128x40xbf16, #tpu.memory_space<vmem>>, %arg3: memref<40x128xbf16, #tpu.memory_space<vmem>>, %arg4: memref<1x128xf32, #tpu.memory_space<vmem>>, %arg5: memref<1x128xf32, #tpu.memory_space<vmem>>) attributes {dimension_semantics = [#tpu.dimension_semantics<parallel>, #tpu.dimension_semantics<arbitrary>], iteration_bounds = array<i64: 2, 2>, scalar_prefetch = 0 : i64, scratch_operands = 0 : i64, tpu.core_type = #tpu.core_type<tc>, window_params = [{transform_indices = @transform_0, window_bounds = array<i64: 128, 40>}, {pipeline_mode = #tpu.pipeline_mode<synchronous>, transform_indices = @transform_1, window_bounds = array<i64: 40, 128>}, {transform_indices = @transform_2, window_bounds = array<i64: 1, 128>}, {transform_indices = @transform_3, window_bounds = array<i64: 1, 128>}]} {
    %c0_i32 = arith.constant 0 : i32
    %0 = arith.cmpi eq, %arg1, %c0_i32 : i32
    %1 = arith.extui %0 : i1 to i32
    %c0_i32_0 = arith.constant 0 : i32
    %2 = arith.cmpi ne, %1, %c0_i32_0 : i32
    scf.if %2 {
      %cst_14 = arith.constant 0.000000e+00 : f32
      %17 = vector.broadcast %cst_14 : f32 to vector<1x128xf32>
      %c0_15 = arith.constant 0 : index
      %c0_16 = arith.constant 0 : index
      %18 = vector.load %arg4[%c0_15, %c0_16] : memref<1x128xf32, #tpu.memory_space<vmem>>, vector<1x128xf32>
      tpu.vector_store %arg4[%c0_15, %c0_16], %17 {strides = array<i32>} : memref<1x128xf32, #tpu.memory_space<vmem>>, vector<1x128xf32>,
      %cst_17 = arith.constant 0.000000e+00 : f32
      %19 = vector.broadcast %cst_17 : f32 to vector<1x128xf32>
      %c0_18 = arith.constant 0 : index
      %c0_19 = arith.constant 0 : index
      %20 = vector.load %arg5[%c0_18, %c0_19] : memref<1x128xf32, #tpu.memory_space<vmem>>, vector<1x128xf32>
      tpu.vector_store %arg5[%c0_18, %c0_19], %19 {strides = array<i32>} : memref<1x128xf32, #tpu.memory_space<vmem>>, vector<1x128xf32>,
    } else {
    }
    %c0 = arith.constant 0 : index
    %c0_1 = arith.constant 0 : index
    %3 = vector.load %arg2[%c0, %c0_1] : memref<128x40xbf16, #tpu.memory_space<vmem>>, vector<128x40xbf16>
    %c0_2 = arith.constant 0 : index
    %c0_3 = arith.constant 0 : index
    %4 = vector.load %arg3[%c0_2, %c0_3] : memref<40x128xbf16, #tpu.memory_space<vmem>>, vector<40x128xbf16>
    %cst = arith.constant dense<0.000000e+00> : vector<128x128xf32>
    %5 = tpu.matmul %3, %4, %cst {dimension_numbers = #tpu.dot_dimension_numbers<[1], [0], [0], [1], [0, 0, 1, 1], [], []>} : vector<128x40xbf16>, vector<40x128xbf16>, vector<128x128xf32> -> vector<128x128xf32>
    %c0_4 = arith.constant 0 : index
    %c0_5 = arith.constant 0 : index
    %6 = vector.load %arg4[%c0_4, %c0_5] : memref<1x128xf32, #tpu.memory_space<vmem>>, vector<1x128xf32>
    %cst_6 = arith.constant dense<0.000000e+00> : vector<128xf32>
    %7 = vector.multi_reduction <add>, %5, %cst_6 [0] : vector<128x128xf32> to vector<128xf32>
    %8 = vector.shape_cast %7 : vector<128xf32> to vector<1x128xf32>
    %9 = arith.addf %6, %8 : vector<1x128xf32>
    %c0_7 = arith.constant 0 : index
    %c0_8 = arith.constant 0 : index
    %10 = vector.load %arg4[%c0_7, %c0_8] : memref<1x128xf32, #tpu.memory_space<vmem>>, vector<1x128xf32>
    tpu.vector_store %arg4[%c0_7, %c0_8], %9 {strides = array<i32>} : memref<1x128xf32, #tpu.memory_space<vmem>>, vector<1x128xf32>,
    %c0_9 = arith.constant 0 : index
    %c0_10 = arith.constant 0 : index
    %11 = vector.load %arg5[%c0_9, %c0_10] : memref<1x128xf32, #tpu.memory_space<vmem>>, vector<1x128xf32>
    %12 = arith.mulf %5, %5 : vector<128x128xf32>
    %cst_11 = arith.constant dense<0.000000e+00> : vector<128xf32>
    %13 = vector.multi_reduction <add>, %12, %cst_11 [0] : vector<128x128xf32> to vector<128xf32>
    %14 = vector.shape_cast %13 : vector<128xf32> to vector<1x128xf32>
    %15 = arith.addf %11, %14 : vector<1x128xf32>
    %c0_12 = arith.constant 0 : index
    %c0_13 = arith.constant 0 : index
    %16 = vector.load %arg5[%c0_12, %c0_13] : memref<1x128xf32, #tpu.memory_space<vmem>>, vector<1x128xf32>
    tpu.vector_store %arg5[%c0_12, %c0_13], %15 {strides = array<i32>} : memref<1x128xf32, #tpu.memory_space<vmem>>, vector<1x128xf32>,
    return
  }
  func.func @transform_0(%arg0: i32, %arg1: i32) -> (i32, i32) {
    %c2_i32 = arith.constant 2 : i32
    %0 = arith.muli %arg0, %c2_i32 : i32
    %1 = arith.addi %0, %arg1 : i32
    %c0_i32 = arith.constant 0 : i32
    %c0_i32_0 = arith.constant 0 : i32
    return %1, %c0_i32 : i32, i32
  }
  func.func @transform_1(%arg0: i32, %arg1: i32) -> (i32, i32) {
    %c0_i32 = arith.constant 0 : i32
    %c0_i32_0 = arith.constant 0 : i32
    %c0_i32_1 = arith.constant 0 : i32
    return %c0_i32, %c0_i32_0 : i32, i32
  }
  func.func @transform_2(%arg0: i32, %arg1: i32) -> (i32, i32) {
    %c0_i32 = arith.constant 0 : i32
    %c0_i32_0 = arith.constant 0 : i32
    return %c0_i32, %arg0 : i32, i32
  }
  func.func @transform_3(%arg0: i32, %arg1: i32) -> (i32, i32) {
    %c0_i32 = arith.constant 0 : i32
    %c0_i32_0 = arith.constant 0 : i32
    return %c0_i32, %arg0 : i32, i32
  }
}

</mosaic_0001>

<llo_original>
// kernel: tpu_custom_call.1
$region0: #{tpu_custom_call.1}
  #allocation0 [shape = 'u32[]', space=smem, size = 0x4, offset = 0x4, fixed_abs, tag = 'smem constant byte address 0x4 - core index']
  #allocation1 [shape = 'u32[144,128]{1,0:T(1,128)}', space=vmem, size = 0x12000, scoped, tag = 'internal scratch']
  %s0 = inlined_call_operand.vmem [shape: bf16[512,40], index: 0, kind: input, shape index: {}]
  %s1 = inlined_call_operand.vmem [shape: bf16[40,128], index: 1, kind: input, shape index: {}]
  %s2 = inlined_call_operand.hbm [shape: f32[1,256], index: 2, kind: output, shape index: {0}]
  %s3 = inlined_call_operand.hbm [shape: f32[1,256], index: 3, kind: output, shape index: {1}]
  %4 = xla_tuple %s2, %s3
  %s5 = sld [smem:[#allocation0]]
  $region53: #{tpu_custom_call.1} parent=0
    _
  %s7 = ssub.s32 1, %s5
  %s8 = scalar_select 0, %s7, %s5
  $region1: #{tpu_custom_call.1} parent=0
    #allocation2 [shape = 'u8[1024]{0}', space=vmem, size = 0x400, scoped, tag = 'output window, operand 0']
    #allocation3 [shape = 's32[2]{0}', space=sflag, size = 0x8, scoped, tag = 'scoped memory for tpu_custom_call.1']
    #allocation4 [shape = 'u8[1024]{0}', space=vmem, size = 0x400, scoped, tag = 'output window, operand 1']
    #allocation5 [shape = 's32[2]{0}', space=sflag, size = 0x8, scoped, tag = 'scoped memory for tpu_custom_call.1']
    %9 = vsyncpa [#allocation3], 0
    %s10 = scalar_lea.sflag [#allocation3], 1
    %11 = vsyncpa %s10, 0
    %12 = vsyncpa [#allocation5], 0
    %s13 = scalar_lea.sflag [#allocation5], 1
    %14 = vsyncpa %s13, 0
    loop: start=0, step=1, limit=6
    $region2: #{tpu_custom_call.1} parent=1 // loop_pre_header
      _
    $region3: #{tpu_custom_call.1} parent=1 // loop_header
      %s16 = sphi 0, %s20
      %p17 = scmp.ge.s32.totalorder %s16, 6
      %s23 = sphi 0, %s35
      %s24 = sphi 0, %s31
      %s25 = sphi 0, %s23
      %s26 = sphi 0, %s24
      %s27 = sphi 0, %s25
      %s28 = sphi 0, %s26
      %s42 = sphi 0, %s44
      %s45 = sphi 0, %s42
      %s46 = sphi 0, %s45
      %s62 = sphi 0, %s46
      %s66 = sphi 0, %s66
      %s68 = sphi 0, %s66
      %s69 = sphi 0, %s68
      %s83 = sphi 0, %s69
      %s89 = sphi 0, %s91
      %s92 = sphi 0, %s89
      %s93 = sphi 0, %s92
      %s109 = sphi 0, %s93
      %s115 = sphi 0, %s117
      %s118 = sphi 0, %s115
      %s119 = sphi 0, %s118
      %s135 = sphi 0, %s119
    $region4: #{tpu_custom_call.1} parent=1 // loop_header_branch
      %19 = sbr.rel (%p17) target = $region8
    $region5: #{tpu_custom_call.1} parent=1 // loop_body
      %s21 = ssub.s32 %s16, 1
      %s22 = ssub.s32 %s16, 2
      %s29 = sadd.s32 1, %s24
      %p30 = scmp.ge.s32.totalorder %s29, 2
      %s31 = scalar_select %p30, 0, %s29
      %s32 = sadd.s32 1, %s23
      %s33 = scalar_select %p30, %s32, %s23
      %p34 = scmp.ge.s32.totalorder %s33, 2
      %s35 = scalar_select %p34, 0, %s33
      %s36 = smul.u32 %s23, 2
      %s37 = sadd.s32 %s36, %s24
      %s38 = smul.u32 %s35, 2
      %s39 = sadd.s32 %s38, %s31
      %s40 = ssub.s32 %s37, %s39
      %p41 = scmp.eq.s32.totalorder %s40, 0
      %s43 = sadd.s32 %s42, 1
      %s44 = scalar_select %p41, %s42, %s43
      %p47 = pneg %p41
      %p48 = scmp.eq.s32.totalorder %s16, 3
      %p49 = por %p47, %p48
      %p50 = scmp.ne.s32.totalorder %s42, %s45
      %p51 = scmp.eq.s32.totalorder %s16, 0
      %p52 = por %p50, %p51
      %p53 = scmp.ne.s32.totalorder %s42, %s45
      %p54 = scmp.eq.s32.totalorder %s21, 3
      %p55 = por %p53, %p54
      %p56 = scmp.ne.s32.totalorder %s45, %s46
      %p57 = scmp.eq.s32.totalorder %s21, 0
      %p58 = por %p56, %p57
      %p59 = scmp.ne.s32.totalorder %s45, %s46
      %p60 = scmp.eq.s32.totalorder %s22, 3
      %p61 = por %p59, %p60
      %p63 = scmp.ne.s32.totalorder %s46, %s62
      %p64 = scmp.eq.s32.totalorder %s22, 0
      %p65 = por %p63, %p64
      %s67 = sadd.s32 %s66, 1
      %p70 = scmp.eq.s32.totalorder %s16, 3
      %p71 = scmp.ne.s32.totalorder %s66, %s68
      %p72 = scmp.eq.s32.totalorder %s16, 0
      %p73 = por %p71, %p72
      %p74 = scmp.ne.s32.totalorder %s66, %s68
      %p75 = scmp.eq.s32.totalorder %s21, 3
      %p76 = por %p74, %p75
      %p77 = scmp.ne.s32.totalorder %s68, %s69
      %p78 = scmp.eq.s32.totalorder %s21, 0
      %p79 = por %p77, %p78
      %p80 = scmp.ne.s32.totalorder %s68, %s69
      %p81 = scmp.eq.s32.totalorder %s22, 3
      %p82 = por %p80, %p81
      %p84 = scmp.ne.s32.totalorder %s69, %s83
      %p85 = scmp.eq.s32.totalorder %s22, 0
      %p86 = por %p84, %p85
      %s87 = ssub.s32 %s23, %s35
      %p88 = scmp.eq.s32.totalorder %s87, 0
      %s90 = sadd.s32 %s89, 1
      %s91 = scalar_select %p88, %s89, %s90
      %p94 = pneg %p88
      %p95 = scmp.eq.s32.totalorder %s16, 3
      %p96 = por %p94, %p95
      %p97 = scmp.ne.s32.totalorder %s89, %s92
      %p98 = scmp.eq.s32.totalorder %s16, 0
      %p99 = por %p97, %p98
      %p100 = scmp.ne.s32.totalorder %s89, %s92
      %p101 = scmp.eq.s32.totalorder %s21, 3
      %p102 = por %p100, %p101
      %p103 = scmp.ne.s32.totalorder %s92, %s93
      %p104 = scmp.eq.s32.totalorder %s21, 0
      %p105 = por %p103, %p104
      %p106 = scmp.ne.s32.totalorder %s92, %s93
      %p107 = scmp.eq.s32.totalorder %s22, 3
      %p108 = por %p106, %p107
      %p110 = scmp.ne.s32.totalorder %s93, %s109
      %p111 = scmp.eq.s32.totalorder %s22, 0
      %p112 = por %p110, %p111
      %s113 = ssub.s32 %s23, %s35
      %p114 = scmp.eq.s32.totalorder %s113, 0
      %s116 = sadd.s32 %s115, 1
      %s117 = scalar_select %p114, %s115, %s116
      %p120 = pneg %p114
      %p121 = scmp.eq.s32.totalorder %s16, 3
      %p122 = por %p120, %p121
      %p123 = scmp.ne.s32.totalorder %s115, %s118
      %p124 = scmp.eq.s32.totalorder %s16, 0
      %p125 = por %p123, %p124
      %p126 = scmp.ne.s32.totalorder %s115, %s118
      %p127 = scmp.eq.s32.totalorder %s21, 3
      %p128 = por %p126, %p127
      %p129 = scmp.ne.s32.totalorder %s118, %s119
      %p130 = scmp.eq.s32.totalorder %s21, 0
      %p131 = por %p129, %p130
      %p132 = scmp.ne.s32.totalorder %s118, %s119
      %p133 = scmp.eq.s32.totalorder %s22, 3
      %p134 = por %p132, %p133
      %p136 = scmp.ne.s32.totalorder %s119, %s135
      %p137 = scmp.eq.s32.totalorder %s22, 0
      %p138 = por %p136, %p137
      %p139 = scmp.le.s32.totalorder 1, %s16
      %p140 = scmp.lt.s32.totalorder %s16, 5
      %p141 = pnand %p139, %p140
      %p142 = pneg %p141
      // Predicated region
      $region9: #{tpu_custom_call.1} parent=5 // pred_check
        _
      $region10: #{tpu_custom_call.1} parent=5 // pred_check_branch
        %144 = sbr.rel (%p141) target = $region12
      $region11: #{tpu_custom_call.1} parent=5 // pred_region
        %s145 = ssub.s32 %s16, 1
        // Predicated region
        $region13: #{tpu_custom_call.1} parent=11 // pred_check
          %p146 = pneg %p79
        $region14: #{tpu_custom_call.1} parent=11 // pred_check_branch
          %148 = sbr.rel (%p146) target = $region16
        $region15: #{tpu_custom_call.1} parent=11 // pred_region
          _
        $region16: #{tpu_custom_call.1} parent=11 // pred_fallthru
          _
      $region12: #{tpu_custom_call.1} parent=5 // pred_fallthru
        _
      %p149 = scmp.lt.s32.totalorder %s16, 4
      // Predicated region
      $region17: #{tpu_custom_call.1} parent=5 // pred_check
        %p150 = pneg %p149
      $region18: #{tpu_custom_call.1} parent=5 // pred_check_branch
        %152 = sbr.rel (%p150) target = $region20
      $region19: #{tpu_custom_call.1} parent=5 // pred_region
        // Predicated region
        $region21: #{tpu_custom_call.1} parent=19 // pred_check
          %p153 = pneg %p52
        $region22: #{tpu_custom_call.1} parent=19 // pred_check_branch
          %155 = sbr.rel (%p153) target = $region24
        $region23: #{tpu_custom_call.1} parent=19 // pred_region
          %s156 = smul.u32 %s23, 2
          %s157 = sadd.s32 %s156, %s24
          %s158 = smul.u32 16, %s157
          %p159 = scmp.lt.s32.totalorder %s158, 63
          %s160 = scalar_select %p159, %s158, 63
          %s161 = smul.addr %s160, 4
          %s162 = scalar_lea.vmem %s0, %s161
          %s163 = smul.u32 %s23, 2
          %s164 = sadd.s32 %s163, %s24
          %s165 = smul.u32 16, %s164
        $region24: #{tpu_custom_call.1} parent=19 // pred_fallthru
          _
      $region20: #{tpu_custom_call.1} parent=5 // pred_fallthru
        _
      %p166 = scmp.le.s32.totalorder 1, %s16
      %p167 = scmp.lt.s32.totalorder %s16, 5
      %p168 = pnand %p166, %p167
      %p169 = pneg %p168
      // Predicated region
      $region25: #{tpu_custom_call.1} parent=5 // pred_check
        _
      $region26: #{tpu_custom_call.1} parent=5 // pred_check_branch
        %171 = sbr.rel (%p168) target = $region28
      $region27: #{tpu_custom_call.1} parent=5 // pred_region
        %s172 = ssub.s32 %s16, 1
        %s173 = smul.u32 %s25, 2
        %s174 = sadd.s32 %s173, %s26
        %s175 = smul.u32 16, %s174
        %p176 = scmp.lt.s32.totalorder %s175, 63
        %s177 = scalar_select %p176, %s175, 63
        %s178 = smul.addr %s177, 4
        %s179 = scalar_lea.vmem %s0, %s178
        %p180 = pneg %p58
        %p181 = pneg %p55
        %p182 = pneg %p79
        %p183 = pneg %p76
        %p184 = pneg %p105
        %p185 = pneg %p102
        %s186 = sand.u32 %s92, 1
        %s187 = scalar_lea.sflag [#allocation3], %s186
        %s188 = sand.u32 %s92, 1
        %s189 = scalar_lea.vmem [#allocation2], %s188
        %p190 = pneg %p131
        %p191 = pneg %p128
        %s192 = sand.u32 %s118, 1
        %s193 = scalar_lea.sflag [#allocation5], %s192
        %s194 = sand.u32 %s118, 1
        %s195 = scalar_lea.vmem [#allocation4], %s194
        %s196 = smul.u32 %s25, 2
        %s197 = sadd.s32 %s196, %s26
        %s198 = smul.u32 16, %s197
        %p199 = scmp.lt.s32.totalorder %s198, 63
        %s200 = scalar_select %p199, %s198, 63
        %s201 = smul.addr %s200, 4
        %s202 = scalar_lea.vmem %s0, %s201
        %s203 = smul.u32 %s25, 2
        %s204 = sadd.s32 %s203, %s26
        %s205 = smul.u32 16, %s204
        %p207 = scmp.eq.s32.totalorder %s26, 0
        // Predicated region
        $region29: #{tpu_custom_call.1} parent=27 // pred_check
          %p208 = pneg %p207
        $region30: #{tpu_custom_call.1} parent=27 // pred_check_branch
          %210 = sbr.rel (%p208) target = $region32
        $region31: #{tpu_custom_call.1} parent=27 // pred_region
          %211 = vst [vmem:[%s189] sm:$0x1] 0.0
          %212 = vst [vmem:[%s195] sm:$0x1] 0.0
        $region32: #{tpu_custom_call.1} parent=27 // pred_fallthru
          _
        %v213 = vld [vmem:[%s202] sm:$0xf]
        %v214 = vld [vmem:[%s202 + $0x4] sm:$0xf]
        %v215 = vld [vmem:[%s202 + $0x8] sm:$0xf]
        %v216 = vld [vmem:[%s202 + $0xc] sm:$0xf]
        %v217 = vld [vmem:[%s202 + $0x10] sm:$0xf]
        %v218 = vld [vmem:[%s202 + $0x14] sm:$0xf]
        %v219 = vld [vmem:[%s202 + $0x18] sm:$0xf]
        %v220 = vld [vmem:[%s202 + $0x1c] sm:$0xf]
        %v221 = vld [vmem:[%s202 + $0x20] sm:$0xf]
        %v222 = vld [vmem:[%s202 + $0x24] sm:$0xf]
        %v223 = vld [vmem:[%s202 + $0x28] sm:$0xf]
        %v224 = vld [vmem:[%s202 + $0x2c] sm:$0xf]
        %v225 = vld [vmem:[%s202 + $0x30] sm:$0xf]
        %v226 = vld [vmem:[%s202 + $0x34] sm:$0xf]
        %v227 = vld [vmem:[%s202 + $0x38] sm:$0xf]
        %v228 = vld [vmem:[%s202 + $0x3c] sm:$0xf]
        %v229 = vld [vmem:[%s1] sm:$0xf]
        %v230 = vld [vmem:[%s1 + $0x4] sm:$0xf]
        %v231 = vld [vmem:[%s1 + $0x8] sm:$0xf]
        %v232 = vld [vmem:[%s1 + $0xc] sm:$0xf]
        %v233 = vld [vmem:[%s1 + $0x10] sm:$0xf]
        %v250 = vunpack.c.l.b16 %v213
        %v251 = vunpack.c.l.b16 %v214
        %v252 = vunpack.c.l.b16 %v215
        %v253 = vunpack.c.l.b16 %v216
        %v254 = vunpack.c.l.b16 %v217
        %v255 = vunpack.c.l.b16 %v218
        %v256 = vunpack.c.l.b16 %v219
        %v257 = vunpack.c.l.b16 %v220
        %v258 = vunpack.c.l.b16 %v221
        %v259 = vunpack.c.l.b16 %v222
        %v260 = vunpack.c.l.b16 %v223
        %v261 = vunpack.c.l.b16 %v224
        %v262 = vunpack.c.l.b16 %v225
        %v263 = vunpack.c.l.b16 %v226
        %v264 = vunpack.c.l.b16 %v227
        %v265 = vunpack.c.l.b16 %v228
        %v266 = vpack.c.b16 %v251, %v250
        %v267 = vpack.c.b16 %v253, %v252
        %v268 = vpack.c.b16 %v255, %v254
        %v269 = vpack.c.b16 %v257, %v256
        %v270 = vpack.c.b16 %v259, %v258
        %v271 = vpack.c.b16 %v261, %v260
        %v272 = vpack.c.b16 %v263, %v262
        %v273 = vpack.c.b16 %v265, %v264
        %v279 = vunpack.c.l.b16 %v229
        %v280 = vunpack.c.l.b16 %v230
        %v281 = vunpack.c.l.b16 %v231
        %v282 = vunpack.c.l.b16 %v232
        %v283 = vunpack.c.l.b16 %v233
        %v284 = vpack.c.b16 %v280, %v279
        %v285 = vpack.c.b16 %v282, %v281
        %v286 = vpack.c.b16 %v283, %v283
        %vm289 = vcmask 326656
        %v291 = vsel %vm289, %v266, 0
        %v294 = vsel %vm289, %v267, 0
        %v297 = vsel %vm289, %v268, 0
        %v300 = vsel %vm289, %v269, 0
        %v303 = vsel %vm289, %v270, 0
        %v306 = vsel %vm289, %v271, 0
        %v309 = vsel %vm289, %v272, 0
        %v312 = vsel %vm289, %v273, 0
        %vm314 = vcmask 1043456
        %v316 = vsel %vm314, %v286, 0
        %318 = vmatprep.subr.bf16.mxu0 0
        %319 = vmatpush1.bf16.msra.mxu0 0
        %320 = vmatprep.subr.bf16.mxu0 0
        %321 = vmatpush1.bf16.msra.mxu0 0
        %322 = vmatprep.subr.bf16.mxu0 0
        %323 = vmatpush1.bf16.msra.mxu0 0
        %324 = vmatprep.subr.bf16.mxu0 0
        %325 = vmatpush1.bf16.msra.mxu0 0
        %326 = vmatprep.subr.bf16.mxu0 0
        %327 = vmatpush1.bf16.msra.mxu0 0
        %328 = vmatprep.subr.bf16.mxu0 0
        %329 = vmatpush1.bf16.msra.mxu0 %v316
        %330 = vmatprep.subr.bf16.mxu0 0
        %331 = vmatpush1.bf16.msra.mxu0 %v285
        %332 = vmatprep.subr.bf16.mxu0 0
        %333 = vmatpush1.bf16.msra.mxu0 %v284
        %334 = vmatprep.subr.bf16.mxu0 0
        %335 = vmatpush2.bf16.msra.mxu0 0
        %336 = vmatprep.subr.bf16.mxu0 0
        %337 = vmatpush2.bf16.msra.mxu0 0
        %338 = vmatprep.subr.bf16.mxu0 0
        %339 = vmatpush2.bf16.msra.mxu0 0
        %340 = vmatprep.subr.bf16.mxu0 0
        %341 = vmatpush2.bf16.msra.mxu0 0
        %342 = vmatprep.subr.bf16.mxu0 0
        %343 = vmatpush2.bf16.msra.mxu0 0
        %344 = vmatprep.subr.bf16.mxu0 0
        %345 = vmatpush2.bf16.msra.mxu0 0
        %346 = vmatprep.subr.bf16.mxu0 0
        %347 = vmatpush2.bf16.msra.mxu0 0
        %348 = vmatprep.subr.bf16.mxu0 0
        %349 = vmatpush2.bf16.msra.mxu0 0
        %350 = vmatprep.mubr.bf16.mxu0 0
        %351 = vmatmul.mubr.bf16.gmra.mxu0 %v291
        %v352 = vpop.f32.mrf.mxu0
        %v353 = vadd.f32 0.0, %v352
        %v354 = vpop.f32.mrf.mxu0
        %v355 = vpop.f32.mrf.mxu0
        %v356 = vadd.f32 0.0, %v355
        %v357 = vpop.f32.mrf.mxu0
        %358 = vmatprep.mubr.bf16.mxu0 0
        %359 = vmatmul.mubr.bf16.gmra.mxu0 %v294
        %v360 = vpop.f32.mrf.mxu0
        %v361 = vadd.f32 0.0, %v360
        %v362 = vpop.f32.mrf.mxu0
        %v363 = vpop.f32.mrf.mxu0
        %v364 = vadd.f32 0.0, %v363
        %v365 = vpop.f32.mrf.mxu0
        %366 = vmatprep.mubr.bf16.mxu0 0
        %367 = vmatmul.mubr.bf16.gmra.mxu0 %v297
        %v368 = vpop.f32.mrf.mxu0
        %v369 = vadd.f32 0.0, %v368
        %v370 = vpop.f32.mrf.mxu0
        %v371 = vpop.f32.mrf.mxu0
        %v372 = vadd.f32 0.0, %v371
        %v373 = vpop.f32.mrf.mxu0
        %374 = vmatprep.mubr.bf16.mxu0 0
        %375 = vmatmul.mubr.bf16.gmra.mxu0 %v300
        %v376 = vpop.f32.mrf.mxu0
        %v377 = vadd.f32 0.0, %v376
        %v378 = vpop.f32.mrf.mxu0
        %v379 = vpop.f32.mrf.mxu0
        %v380 = vadd.f32 0.0, %v379
        %v381 = vpop.f32.mrf.mxu0
        %382 = vmatprep.mubr.bf16.mxu0 0
        %383 = vmatmul.mubr.bf16.gmra.mxu0 %v303
        %v384 = vpop.f32.mrf.mxu0
        %v385 = vadd.f32 0.0, %v384
        %v386 = vpop.f32.mrf.mxu0
        %v387 = vpop.f32.mrf.mxu0
        %v388 = vadd.f32 0.0, %v387
        %v389 = vpop.f32.mrf.mxu0
        %390 = vmatprep.mubr.bf16.mxu0 0
        %391 = vmatmul.mubr.bf16.gmra.mxu0 %v306
        %v392 = vpop.f32.mrf.mxu0
        %v393 = vadd.f32 0.0, %v392
        %v394 = vpop.f32.mrf.mxu0
        %v395 = vpop.f32.mrf.mxu0
        %v396 = vadd.f32 0.0, %v395
        %v397 = vpop.f32.mrf.mxu0
        %398 = vmatprep.mubr.bf16.mxu0 0
        %399 = vmatmul.mubr.bf16.gmra.mxu0 %v309
        %v400 = vpop.f32.mrf.mxu0
        %v401 = vadd.f32 0.0, %v400
        %v402 = vpop.f32.mrf.mxu0
        %v403 = vpop.f32.mrf.mxu0
        %v404 = vadd.f32 0.0, %v403
        %v405 = vpop.f32.mrf.mxu0
        %406 = vmatprep.mubr.bf16.mxu0 0
        %407 = vmatmul.mubr.bf16.gmra.mxu0 %v312
        %v408 = vpop.f32.mrf.mxu0
        %v409 = vadd.f32 0.0, %v408
        %v410 = vpop.f32.mrf.mxu0
        %v411 = vpop.f32.mrf.mxu0
        %v412 = vadd.f32 0.0, %v411
        %v413 = vpop.f32.mrf.mxu0
        %414 = vdwg.mxu0
        %v415 = vld [vmem:[%s189] sm:$0x1]
        %v416 = vadd.f32 %v353, %v356
        %v417 = vadd.f32 %v416, %v361
        %v418 = vadd.f32 %v417, %v364
        %v419 = vadd.f32 %v418, %v369
        %v420 = vadd.f32 %v419, %v372
        %v421 = vadd.f32 %v420, %v377
        %v422 = vadd.f32 %v421, %v380
        %v423 = vadd.f32 %v422, %v385
        %v424 = vadd.f32 %v423, %v388
        %v425 = vadd.f32 %v424, %v393
        %v426 = vadd.f32 %v425, %v396
        %v427 = vadd.f32 %v426, %v401
        %v428 = vadd.f32 %v427, %v404
        %v429 = vadd.f32 %v428, %v409
        %v430 = vadd.f32 %v429, %v412
        %v431 = vrot.slane %v430, 4
        %v432 = vadd.f32 %v430, %v431
        %v433 = vrot.slane %v432, 2
        %v434 = vadd.f32 %v432, %v433
        %v435 = vrot.slane %v434, 1
        %v436 = vadd.f32 %v434, %v435
        %v437 = vadd.f32 %v415, %v436
        %438 = vst [vmem:[%s189] sm:$0x1] %v437
        %v439 = vld [vmem:[%s195] sm:$0x1]
        %v440 = vmul.f32 %v353, %v353
        %v441 = vmul.f32 %v356, %v356
        %v442 = vmul.f32 %v361, %v361
        %v443 = vmul.f32 %v364, %v364
        %v444 = vmul.f32 %v369, %v369
        %v445 = vmul.f32 %v372, %v372
        %v446 = vmul.f32 %v377, %v377
        %v447 = vmul.f32 %v380, %v380
        %v448 = vmul.f32 %v385, %v385
        %v449 = vmul.f32 %v388, %v388
        %v450 = vmul.f32 %v393, %v393
        %v451 = vmul.f32 %v396, %v396
        %v452 = vmul.f32 %v401, %v401
        %v453 = vmul.f32 %v404, %v404
        %v454 = vmul.f32 %v409, %v409
        %v455 = vmul.f32 %v412, %v412
        %v456 = vadd.f32 %v440, %v441
        %v457 = vadd.f32 %v456, %v442
        %v458 = vadd.f32 %v457, %v443
        %v459 = vadd.f32 %v458, %v444
        %v460 = vadd.f32 %v459, %v445
        %v461 = vadd.f32 %v460, %v446
        %v462 = vadd.f32 %v461, %v447
        %v463 = vadd.f32 %v462, %v448
        %v464 = vadd.f32 %v463, %v449
        %v465 = vadd.f32 %v464, %v450
        %v466 = vadd.f32 %v465, %v451
        %v467 = vadd.f32 %v466, %v452
        %v468 = vadd.f32 %v467, %v453
        %v469 = vadd.f32 %v468, %v454
        %v470 = vadd.f32 %v469, %v455
        %v471 = vrot.slane %v470, 4
        %v472 = vadd.f32 %v470, %v471
        %v473 = vrot.slane %v472, 2
        %v474 = vadd.f32 %v472, %v473
        %v475 = vrot.slane %v474, 1
        %v476 = vadd.f32 %v474, %v475
        %v477 = vadd.f32 %v439, %v476
        %478 = vst [vmem:[%s195] sm:$0x1] %v477
        %s479 = sand.u32 %s92, 1
        %s480 = scalar_lea.sflag [#allocation3], %s479
        %s481 = sand.u32 %s92, 1
        %s482 = scalar_lea.vmem [#allocation2], %s481
        %s483 = sand.u32 %s118, 1
        %s484 = scalar_lea.sflag [#allocation5], %s483
        %s485 = sand.u32 %s118, 1
        %s486 = scalar_lea.vmem [#allocation4], %s485
        // Predicated region
        $region33: #{tpu_custom_call.1} parent=27 // pred_check
          %p487 = pneg %p102
        $region34: #{tpu_custom_call.1} parent=27 // pred_check_branch
          %489 = sbr.rel (%p487) target = $region36
        $region35: #{tpu_custom_call.1} parent=27 // pred_region
          %s491 = ssub.s32 16, 16
          %492 = vsyncadd %s480, %s491
          %s493 = smul.addr %s25, 16
          %s494 = scalar_lea.hbm %s2, %s493
          %s496 = sshll.u32 %s482, 4
          %s497 = int_to_ptr.vmem [resolvable:$true] %s496
          %499 = dma.vmem_to_hbm [thread:$0]  %s497, 16, %s494, %s480
        $region36: #{tpu_custom_call.1} parent=27 // pred_fallthru
          _
        // Predicated region
        $region37: #{tpu_custom_call.1} parent=27 // pred_check
          %p500 = pneg %p128
        $region38: #{tpu_custom_call.1} parent=27 // pred_check_branch
          %502 = sbr.rel (%p500) target = $region40
        $region39: #{tpu_custom_call.1} parent=27 // pred_region
          %s504 = ssub.s32 16, 16
          %505 = vsyncadd %s484, %s504
          %s506 = smul.addr %s25, 16
          %s507 = scalar_lea.hbm %s3, %s506
          %s509 = sshll.u32 %s486, 4
          %s510 = int_to_ptr.vmem [resolvable:$true] %s509
          %512 = dma.vmem_to_hbm [thread:$0]  %s510, 16, %s507, %s484
        $region40: #{tpu_custom_call.1} parent=27 // pred_fallthru
          _
      $region28: #{tpu_custom_call.1} parent=5 // pred_fallthru
        _
      %p513 = scmp.le.s32.totalorder 2, %s16
      // Predicated region
      $region41: #{tpu_custom_call.1} parent=5 // pred_check
        %p514 = pneg %p513
      $region42: #{tpu_custom_call.1} parent=5 // pred_check_branch
        %516 = sbr.rel (%p514) target = $region44
      $region43: #{tpu_custom_call.1} parent=5 // pred_region
        %s517 = ssub.s32 %s16, 2
        // Predicated region
        $region45: #{tpu_custom_call.1} parent=43 // pred_check
          %p518 = pneg %p108
        $region46: #{tpu_custom_call.1} parent=43 // pred_check_branch
          %520 = sbr.rel (%p518) target = $region48
        $region47: #{tpu_custom_call.1} parent=43 // pred_region
          %s521 = sand.u32 %s93, 1
          %s522 = scalar_lea.sflag [#allocation3], %s521
          %s523 = sand.u32 %s93, 1
          %s524 = scalar_lea.vmem [#allocation2], %s523
          %525 = dma.done %s522, 16
        $region48: #{tpu_custom_call.1} parent=43 // pred_fallthru
          _
        // Predicated region
        $region49: #{tpu_custom_call.1} parent=43 // pred_check
          %p526 = pneg %p134
        $region50: #{tpu_custom_call.1} parent=43 // pred_check_branch
          %528 = sbr.rel (%p526) target = $region52
        $region51: #{tpu_custom_call.1} parent=43 // pred_region
          %s529 = sand.u32 %s119, 1
          %s530 = scalar_lea.sflag [#allocation5], %s529
          %s531 = sand.u32 %s119, 1
          %s532 = scalar_lea.vmem [#allocation4], %s531
          %533 = dma.done %s530, 16
        $region52: #{tpu_custom_call.1} parent=43 // pred_fallthru
          _
      $region44: #{tpu_custom_call.1} parent=5 // pred_fallthru
        _
    $region6: #{tpu_custom_call.1} parent=1 // loop_footer
      %s20 = sadd.s32 1, %s16
    $region7: #{tpu_custom_call.1} parent=1 // loop_footer_branch
      %15 = sbr.rel target = $region3
    $region8: #{tpu_custom_call.1} parent=1 // loop_exit
      _
    %534 = vsyncpa [#allocation3], 1
    %s535 = scalar_lea.sflag [#allocation3], 1
    %536 = vsyncpa %s535, 1
    %537 = vsyncpa [#allocation5], 1
    %s538 = scalar_lea.sflag [#allocation5], 1
    %539 = vsyncpa %s538, 1

</llo_original>
